<compile_context>
chip_gen: v5e
topology: v5e:2x2
jax: 0.10.0
libtpu: 0.0.40
codegen_flags: <defaults>
</compile_context>

<pallas_src>
import functools

import jax
import jax.numpy as jnp
from jax.experimental import pallas as pl
from jax.experimental.pallas import tpu as pltpu


def _round_up(x, m):
    return (x + m - 1) // m * m


# ----------------------------- Pallas kernel --------------------------------
def _map_linear_kernel(x_ref, w_ref, b_ref, tok_ref, o_ref, *,
                       tok_tile, tok_local, guard_last):
    """One (batch, seq-tile) block:
         o[0, :, :]                 = x_tile @ W + b       (f32 accumulate)
         o[0, tok_local, :]         = precomputed token row (last tile only)
    x: (1, TILE_T, K) bf16   w: (K, N_pad) bf16   b/tok: (1, N_pad) f32
    o: (1, TILE_T, N_pad)
    """
    ti = pl.program_id(1)

    def _compute_tile():
        y = jnp.dot(x_ref[0], w_ref[...],
                    preferred_element_type=jnp.float32) + b_ref[...]
        o_ref[0] = y.astype(o_ref.dtype)

    if guard_last:
        # Last tile holds only the token row (T % TILE_T == 0): skip the
        # wasted full-tile matmul there.
        pl.when(ti != tok_tile)(_compute_tile)
    else:
        _compute_tile()

    @pl.when(ti == tok_tile)
    def _():
        o_ref[0, tok_local:tok_local + 1, :] = tok_ref[...].astype(o_ref.dtype)


def mapped_linear(x, token_vec, w, b, *, tile_t=None,
                  compute_dtype=jnp.bfloat16, out_dtype=jnp.float32):
    """x: (B, T, K), token_vec: (K,), w: (K, N), b: (N,) -> (B, T+1, N).

    Rows 0..T-1 of the output are x @ w + b, row T is token_vec @ w + b,
    i.e. fused `cat([x, token], dim=1)` followed by nn.Linear.
    Matmul operands stream in `compute_dtype` (bf16 by default) with f32
    accumulation; bias add and output stay `out_dtype`.
    """
    bsz, seq, k = x.shape
    n = w.shape[1]

    # Lane-dense output: pad N (hidden) to a multiple of 128.
    n_pad = _round_up(max(n, 128), 128)
    if n_pad != n:
        w = jnp.pad(w, ((0, 0), (0, n_pad - n)))
        b = jnp.pad(b, (0, n_pad - n))

    # bf16 streaming operands (no-op casts if already compute_dtype).
    x_c = x.astype(compute_dtype)
    w_c = w.astype(compute_dtype)
    b2 = b.reshape(1, n_pad).astype(jnp.float32)

    # Precompute the token row once with plain XLA (tiny op).
    tok_row = (jnp.dot(token_vec.astype(compute_dtype).reshape(1, k), w_c,
                       preferred_element_type=jnp.float32) + b2)

    # Sequence tiling.
    seq_out = seq + 1
    if tile_t is None:
        tile_t = min(_round_up(seq_out, 8), 512)
    else:
        tile_t = _round_up(tile_t, 8)
    num_out_tiles = pl.cdiv(seq_out, tile_t)
    num_x_tiles = max(1, pl.cdiv(seq, tile_t))
    tok_tile = num_out_tiles - 1                 # tile containing row T
    tok_local = seq - tok_tile * tile_t          # row T's index inside it
    guard_last = num_out_tiles > num_x_tiles     # last tile has no x rows

    kernel = functools.partial(_map_linear_kernel, tok_tile=tok_tile,
                               tok_local=tok_local, guard_last=guard_last)

    in_itemsize = jnp.dtype(compute_dtype).itemsize
    out_itemsize = jnp.dtype(out_dtype).itemsize

    out = pl.pallas_call(
        kernel,
        out_shape=jax.ShapeDtypeStruct((bsz, seq_out, n_pad), out_dtype),
        grid_spec=pltpu.PrefetchScalarGridSpec(
            num_scalar_prefetch=0,
            grid=(bsz, num_out_tiles),
            in_specs=[
                # streamed per (batch, seq-tile); clamp the tile index so a
                # token-only last tile re-reads (and ignores) the last x tile.
                pl.BlockSpec(
                    (1, tile_t, k),
                    lambda bi, ti: (bi, jnp.minimum(ti, num_x_tiles - 1), 0)),
                # resident operands: loaded once, single-buffered.
                pl.BlockSpec((k, n_pad), lambda bi, ti: (0, 0),
                             pipeline_mode=pl.Buffered(1)),
                pl.BlockSpec((1, n_pad), lambda bi, ti: (0, 0),
                             pipeline_mode=pl.Buffered(1)),
                pl.BlockSpec((1, n_pad), lambda bi, ti: (0, 0),
                             pipeline_mode=pl.Buffered(1)),
            ],
            out_specs=pl.BlockSpec((1, tile_t, n_pad),
                                   lambda bi, ti: (bi, ti, 0)),
        ),
        compiler_params=pltpu.CompilerParams(
            # independent (batch, seq-tile) blocks.
            dimension_semantics=("parallel", "parallel")),
        cost_estimate=pl.CostEstimate(
            flops=int(2 * bsz * seq * k * n_pad),
            transcendentals=0,
            bytes_accessed=int(bsz * seq * k * in_itemsize
                               + k * n_pad * in_itemsize
                               + 2 * n_pad * 4
                               + bsz * seq_out * n_pad * out_itemsize)),
    )(x_c, w_c, b2, tok_row)

    if n_pad != n:
        out = out[..., :n]
    return out


# --------------------------- Mapping forward ---------------------------------
def _generate_mask(seq_len_plus1, x_len):
    # mask[b, t] = 1 if t < x_len[b] else 0, uint8  (matches torch .byte())
    t = jnp.arange(seq_len_plus1)[None, :]
    return (t < x_len[:, None]).astype(jnp.uint8)


def mapping_forward(params, frames_feat, frames_len, words_feat, words_len):
    bsz, n_frames, _ = frames_feat.shape
    _, n_words, _ = words_feat.shape

    # dropout = identity in eval mode.
    frames_out = mapped_linear(frames_feat, params["end_frame_vec"],
                               params["frame_fc_w"], params["frame_fc_b"])
    frames_mask = _generate_mask(n_frames + 1, frames_len)

    words_out = mapped_linear(words_feat, params["start_word_vec"],
                              params["word_fc_w"], params["word_fc_b"])
    words_mask = _generate_mask(n_words + 1, words_len)

    return frames_out, frames_mask, words_out, words_mask


# ------------------------------ parameter init -------------------------------
def init_params(key, frame_dim, word_dim, hidden):
    k1, k2, k3, k4 = jax.random.split(key, 4)
    fb = 1.0 / jnp.sqrt(frame_dim)
    wb = 1.0 / jnp.sqrt(word_dim)
    return {
        # stored as (in_dim, out_dim) so kernel does x @ W directly
        "frame_fc_w": jax.random.uniform(k1, (frame_dim, hidden), jnp.float32, -fb, fb),
        "frame_fc_b": jax.random.uniform(k2, (hidden,), jnp.float32, -fb, fb),
        "word_fc_w": jax.random.uniform(k3, (word_dim, hidden), jnp.float32, -wb, wb),
        "word_fc_b": jax.random.uniform(k4, (hidden,), jnp.float32, -wb, wb),
        # zero-initialized learnable tokens, as in the PyTorch __init__
        "start_word_vec": jnp.zeros((word_dim,), jnp.float32),
        "end_frame_vec": jnp.zeros((frame_dim,), jnp.float32),
    }


def _ref_mapped_linear(x, vec, w, b):
    """Plain-JAX reference with the same bf16-operand / f32-accumulate math."""
    bsz = x.shape[0]
    xc = jnp.concatenate(
        [x, jnp.broadcast_to(vec.reshape(1, 1, -1), (bsz, 1, vec.shape[0]))],
        axis=1)
    return jnp.einsum("btk,kn->btn", xc.astype(jnp.bfloat16),
                      w.astype(jnp.bfloat16),
                      preferred_element_type=jnp.float32) + b


if __name__ == "__main__":
    key = jax.random.PRNGKey(0)
    bsz, n_frames, n_words = 2, 8, 11
    frame_dim, word_dim, hidden = 32, 16, 32

    kf, kw, kp, kv1, kv2 = jax.random.split(key, 5)
    frames_feat = jax.random.normal(kf, (bsz, n_frames, frame_dim), jnp.float32)
    words_feat = jax.random.normal(kw, (bsz, n_words, word_dim), jnp.float32)
    frames_len = jnp.array([8, 5], jnp.int32)
    words_len = jnp.array([6, 11], jnp.int32)

    params = init_params(kp, frame_dim, word_dim, hidden)
    # make the learnable tokens non-zero so the fused token-row path is tested
    params["end_frame_vec"] = 0.1 * jax.random.normal(kv1, (frame_dim,), jnp.float32)
    params["start_word_vec"] = 0.1 * jax.random.normal(kv2, (word_dim,), jnp.float32)

    fwd = jax.jit(functools.partial(mapping_forward, params))
    frames_out, frames_mask, words_out, words_mask = fwd(
        frames_feat, frames_len, words_feat, words_len)
    jax.block_until_ready((frames_out, frames_mask, words_out, words_mask))

    # --- correctness vs plain JAX (matching bf16 operand / f32 accum math) ---
    ref_frames = _ref_mapped_linear(frames_feat, params["end_frame_vec"],
                                    params["frame_fc_w"], params["frame_fc_b"])
    assert frames_out.shape == (bsz, n_frames + 1, hidden)
    assert jnp.allclose(frames_out, ref_frames, atol=1e-3, rtol=1e-3), \
        "frame branch mismatch"

    ref_words = _ref_mapped_linear(words_feat, params["start_word_vec"],
                                   params["word_fc_w"], params["word_fc_b"])
    assert words_out.shape == (bsz, n_words + 1, hidden)
    assert jnp.allclose(words_out, ref_words, atol=1e-3, rtol=1e-3), \
        "word branch mismatch"

    assert frames_mask.shape == (bsz, n_frames + 1) and frames_mask.dtype == jnp.uint8
    assert words_mask.shape == (bsz, n_words + 1) and words_mask.dtype == jnp.uint8
    assert jnp.array_equal(frames_mask[1],
                           jnp.array([1, 1, 1, 1, 1, 0, 0, 0, 0], jnp.uint8))

    # --- exercise the multi-tile path (T % TILE_T == 0 -> token-only tile) ---
    k5, k6, k7, k8 = jax.random.split(key, 4)
    x3 = jax.random.normal(k5, (2, 16, 32), jnp.float32)
    v3 = 0.1 * jax.random.normal(k6, (32,), jnp.float32)
    w3 = jax.random.normal(k7, (32, 32), jnp.float32) * 0.1
    b3 = jax.random.normal(k8, (32,), jnp.float32) * 0.1
    out3 = jax.block_until_ready(
        jax.jit(functools.partial(mapped_linear, tile_t=8))(x3, v3, w3, b3))
    ref3 = _ref_mapped_linear(x3, v3, w3, b3)
    assert out3.shape == (2, 17, 32)
    assert jnp.allclose(out3, ref3, atol=1e-3, rtol=1e-3), "multi-tile mismatch"

    print("KERNEL_OK")
</pallas_src>

<mosaic_0001>
module attributes {stable_mosaic.version = 11 : i64} {
  func.func @_map_linear_kernel(%arg0: i32, %arg1: i32, %arg2: memref<1x16x16xbf16, #tpu.memory_space<vmem>>, %arg3: memref<16x128xbf16, #tpu.memory_space<vmem>>, %arg4: memref<1x128xf32, #tpu.memory_space<vmem>>, %arg5: memref<1x128xf32, #tpu.memory_space<vmem>>, %arg6: memref<1x16x128xf32, #tpu.memory_space<vmem>>) attributes {dimension_semantics = [#tpu.dimension_semantics<parallel>, #tpu.dimension_semantics<parallel>], iteration_bounds = array<i64: 2, 1>, scalar_prefetch = 0 : i64, scratch_operands = 0 : i64, tpu.core_type = #tpu.core_type<tc>, window_params = [{transform_indices = @transform_0, window_bounds = array<i64: 1, 16, 16>}, {pipeline_mode = #tpu.pipeline_mode<synchronous>, transform_indices = @transform_1, window_bounds = array<i64: 16, 128>}, {pipeline_mode = #tpu.pipeline_mode<synchronous>, transform_indices = @transform_2, window_bounds = array<i64: 1, 128>}, {pipeline_mode = #tpu.pipeline_mode<synchronous>, transform_indices = @transform_3, window_bounds = array<i64: 1, 128>}, {transform_indices = @transform_4, window_bounds = array<i64: 1, 16, 128>}]} {
    %c0 = arith.constant 0 : index
    %c0_0 = arith.constant 0 : index
    %c0_1 = arith.constant 0 : index
    %0 = vector.load %arg2[%c0, %c0_0, %c0_1] : memref<1x16x16xbf16, #tpu.memory_space<vmem>>, vector<1x16x16xbf16>
    %1 = vector.shape_cast %0 : vector<1x16x16xbf16> to vector<16x16xbf16>
    %c0_2 = arith.constant 0 : index
    %c0_3 = arith.constant 0 : index
    %2 = vector.load %arg3[%c0_2, %c0_3] : memref<16x128xbf16, #tpu.memory_space<vmem>>, vector<16x128xbf16>
    %cst = arith.constant dense<0.000000e+00> : vector<16x128xf32>
    %3 = tpu.matmul %1, %2, %cst {dimension_numbers = #tpu.dot_dimension_numbers<[1], [0], [0], [1], [0, 0, 1, 1], [], []>} : vector<16x16xbf16>, vector<16x128xbf16>, vector<16x128xf32> -> vector<16x128xf32>
    %c0_4 = arith.constant 0 : index
    %c0_5 = arith.constant 0 : index
    %4 = vector.load %arg4[%c0_4, %c0_5] : memref<1x128xf32, #tpu.memory_space<vmem>>, vector<1x128xf32>
    %5 = vector.broadcast %4 : vector<1x128xf32> to vector<16x128xf32>
    %6 = arith.addf %3, %5 : vector<16x128xf32>
    %c0_6 = arith.constant 0 : index
    %c0_7 = arith.constant 0 : index
    %c0_8 = arith.constant 0 : index
    %7 = vector.load %arg6[%c0_6, %c0_7, %c0_8] : memref<1x16x128xf32, #tpu.memory_space<vmem>>, vector<1x16x128xf32>
    %8 = vector.shape_cast %7 : vector<1x16x128xf32> to vector<16x128xf32>
    %9 = vector.shape_cast %6 : vector<16x128xf32> to vector<1x16x128xf32>
    tpu.vector_store %arg6[%c0_6, %c0_7, %c0_8], %9 {strides = array<i32>} : memref<1x16x128xf32, #tpu.memory_space<vmem>>, vector<1x16x128xf32>,
    %c0_i32 = arith.constant 0 : i32
    %10 = arith.cmpi eq, %arg1, %c0_i32 : i32
    %11 = arith.extui %10 : i1 to i32
    %c0_i32_9 = arith.constant 0 : i32
    %12 = arith.cmpi ne, %11, %c0_i32_9 : i32
    scf.if %12 {
      %c0_10 = arith.constant 0 : index
      %c0_11 = arith.constant 0 : index
      %13 = vector.load %arg5[%c0_10, %c0_11] : memref<1x128xf32, #tpu.memory_space<vmem>>, vector<1x128xf32>
      %c0_12 = arith.constant 0 : index
      %c11 = arith.constant 11 : index
      %c0_13 = arith.constant 0 : index
      %14 = vector.load %arg6[%c0_12, %c11, %c0_13] : memref<1x16x128xf32, #tpu.memory_space<vmem>>, vector<1x1x128xf32>
      %15 = vector.shape_cast %14 : vector<1x1x128xf32> to vector<1x128xf32>
      %16 = vector.shape_cast %13 : vector<1x128xf32> to vector<1x1x128xf32>
      tpu.vector_store %arg6[%c0_12, %c11, %c0_13], %16 {strides = array<i32>} : memref<1x16x128xf32, #tpu.memory_space<vmem>>, vector<1x1x128xf32>,
    } else {
    }
    return
  }
  func.func @transform_0(%arg0: i32, %arg1: i32) -> (i32, i32, i32) {
    %c0_i32 = arith.constant 0 : i32
    %0 = arith.minsi %arg1, %c0_i32 : i32
    %c0_i32_0 = arith.constant 0 : i32
    %c0_i32_1 = arith.constant 0 : i32
    return %arg0, %0, %c0_i32_0 : i32, i32, i32
  }
  func.func @transform_1(%arg0: i32, %arg1: i32) -> (i32, i32) {
    %c0_i32 = arith.constant 0 : i32
    %c0_i32_0 = arith.constant 0 : i32
    %c0_i32_1 = arith.constant 0 : i32
    return %c0_i32, %c0_i32_0 : i32, i32
  }
  func.func @transform_2(%arg0: i32, %arg1: i32) -> (i32, i32) {
    %c0_i32 = arith.constant 0 : i32
    %c0_i32_0 = arith.constant 0 : i32
    %c0_i32_1 = arith.constant 0 : i32
    return %c0_i32, %c0_i32_0 : i32, i32
  }
  func.func @transform_3(%arg0: i32, %arg1: i32) -> (i32, i32) {
    %c0_i32 = arith.constant 0 : i32
    %c0_i32_0 = arith.constant 0 : i32
    %c0_i32_1 = arith.constant 0 : i32
    return %c0_i32, %c0_i32_0 : i32, i32
  }
  func.func @transform_4(%arg0: i32, %arg1: i32) -> (i32, i32, i32) {
    %c0_i32 = arith.constant 0 : i32
    %c0_i32_0 = arith.constant 0 : i32
    return %arg0, %arg1, %c0_i32 : i32, i32, i32
  }
}

module attributes {stable_mosaic.version = 11 : i64} {
  func.func @_map_linear_kernel(%arg0: i32, %arg1: i32, %arg2: memref<1x16x32xbf16, #tpu.memory_space<vmem>>, %arg3: memref<32x128xbf16, #tpu.memory_space<vmem>>, %arg4: memref<1x128xf32, #tpu.memory_space<vmem>>, %arg5: memref<1x128xf32, #tpu.memory_space<vmem>>, %arg6: memref<1x16x128xf32, #tpu.memory_space<vmem>>) attributes {dimension_semantics = [#tpu.dimension_semantics<parallel>, #tpu.dimension_semantics<parallel>], iteration_bounds = array<i64: 2, 1>, scalar_prefetch = 0 : i64, scratch_operands = 0 : i64, tpu.core_type = #tpu.core_type<tc>, window_params = [{transform_indices = @transform_0, window_bounds = array<i64: 1, 16, 32>}, {pipeline_mode = #tpu.pipeline_mode<synchronous>, transform_indices = @transform_1, window_bounds = array<i64: 32, 128>}, {pipeline_mode = #tpu.pipeline_mode<synchronous>, transform_indices = @transform_2, window_bounds = array<i64: 1, 128>}, {pipeline_mode = #tpu.pipeline_mode<synchronous>, transform_indices = @transform_3, window_bounds = array<i64: 1, 128>}, {transform_indices = @transform_4, window_bounds = array<i64: 1, 16, 128>}]} {
    %c0 = arith.constant 0 : index
    %c0_0 = arith.constant 0 : index
    %c0_1 = arith.constant 0 : index
    %0 = vector.load %arg2[%c0, %c0_0, %c0_1] : memref<1x16x32xbf16, #tpu.memory_space<vmem>>, vector<1x16x32xbf16>
    %1 = vector.shape_cast %0 : vector<1x16x32xbf16> to vector<16x32xbf16>
    %c0_2 = arith.constant 0 : index
    %c0_3 = arith.constant 0 : index
    %2 = vector.load %arg3[%c0_2, %c0_3] : memref<32x128xbf16, #tpu.memory_space<vmem>>, vector<32x128xbf16>
    %cst = arith.constant dense<0.000000e+00> : vector<16x128xf32>
    %3 = tpu.matmul %1, %2, %cst {dimension_numbers = #tpu.dot_dimension_numbers<[1], [0], [0], [1], [0, 0, 1, 1], [], []>} : vector<16x32xbf16>, vector<32x128xbf16>, vector<16x128xf32> -> vector<16x128xf32>
    %c0_4 = arith.constant 0 : index
    %c0_5 = arith.constant 0 : index
    %4 = vector.load %arg4[%c0_4, %c0_5] : memref<1x128xf32, #tpu.memory_space<vmem>>, vector<1x128xf32>
    %5 = vector.broadcast %4 : vector<1x128xf32> to vector<16x128xf32>
    %6 = arith.addf %3, %5 : vector<16x128xf32>
    %c0_6 = arith.constant 0 : index
    %c0_7 = arith.constant 0 : index
    %c0_8 = arith.constant 0 : index
    %7 = vector.load %arg6[%c0_6, %c0_7, %c0_8] : memref<1x16x128xf32, #tpu.memory_space<vmem>>, vector<1x16x128xf32>
    %8 = vector.shape_cast %7 : vector<1x16x128xf32> to vector<16x128xf32>
    %9 = vector.shape_cast %6 : vector<16x128xf32> to vector<1x16x128xf32>
    tpu.vector_store %arg6[%c0_6, %c0_7, %c0_8], %9 {strides = array<i32>} : memref<1x16x128xf32, #tpu.memory_space<vmem>>, vector<1x16x128xf32>,
    %c0_i32 = arith.constant 0 : i32
    %10 = arith.cmpi eq, %arg1, %c0_i32 : i32
    %11 = arith.extui %10 : i1 to i32
    %c0_i32_9 = arith.constant 0 : i32
    %12 = arith.cmpi ne, %11, %c0_i32_9 : i32
    scf.if %12 {
      %c0_10 = arith.constant 0 : index
      %c0_11 = arith.constant 0 : index
      %13 = vector.load %arg5[%c0_10, %c0_11] : memref<1x128xf32, #tpu.memory_space<vmem>>, vector<1x128xf32>
      %c0_12 = arith.constant 0 : index
      %c8 = arith.constant 8 : index
      %c0_13 = arith.constant 0 : index
      %14 = vector.load %arg6[%c0_12, %c8, %c0_13] : memref<1x16x128xf32, #tpu.memory_space<vmem>>, vector<1x1x128xf32>
      %15 = vector.shape_cast %14 : vector<1x1x128xf32> to vector<1x128xf32>
      %16 = vector.shape_cast %13 : vector<1x128xf32> to vector<1x1x128xf32>
      tpu.vector_store %arg6[%c0_12, %c8, %c0_13], %16 {strides = array<i32>} : memref<1x16x128xf32, #tpu.memory_space<vmem>>, vector<1x1x128xf32>,
    } else {
    }
    return
  }
  func.func @transform_0(%arg0: i32, %arg1: i32) -> (i32, i32, i32) {
    %c0_i32 = arith.constant 0 : i32
    %0 = arith.minsi %arg1, %c0_i32 : i32
    %c0_i32_0 = arith.constant 0 : i32
    %c0_i32_1 = arith.constant 0 : i32
    return %arg0, %0, %c0_i32_0 : i32, i32, i32
  }
  func.func @transform_1(%arg0: i32, %arg1: i32) -> (i32, i32) {
    %c0_i32 = arith.constant 0 : i32
    %c0_i32_0 = arith.constant 0 : i32
    %c0_i32_1 = arith.constant 0 : i32
    return %c0_i32, %c0_i32_0 : i32, i32
  }
  func.func @transform_2(%arg0: i32, %arg1: i32) -> (i32, i32) {
    %c0_i32 = arith.constant 0 : i32
    %c0_i32_0 = arith.constant 0 : i32
    %c0_i32_1 = arith.constant 0 : i32
    return %c0_i32, %c0_i32_0 : i32, i32
  }
  func.func @transform_3(%arg0: i32, %arg1: i32) -> (i32, i32) {
    %c0_i32 = arith.constant 0 : i32
    %c0_i32_0 = arith.constant 0 : i32
    %c0_i32_1 = arith.constant 0 : i32
    return %c0_i32, %c0_i32_0 : i32, i32
  }
  func.func @transform_4(%arg0: i32, %arg1: i32) -> (i32, i32, i32) {
    %c0_i32 = arith.constant 0 : i32
    %c0_i32_0 = arith.constant 0 : i32
    return %arg0, %arg1, %c0_i32 : i32, i32, i32
  }
}

</mosaic_0001>

<llo_original>
// kernel: mapping_forward.3
$region0: #{mapping_forward.3}
  #allocation0 [shape = 'u32[]', space=smem, size = 0x4, offset = 0x4, fixed_abs, tag = 'smem constant byte address 0x4 - core index']
  #allocation1 [shape = 'u32[72,128]{1,0:T(1,128)}', space=vmem, size = 0x9000, scoped, tag = 'internal scratch']
  %s0 = inlined_call_operand.vmem [shape: bf16[2,11,16], index: 0, kind: input, shape index: {}]
  %s1 = inlined_call_operand.vmem [shape: bf16[16,128], index: 1, kind: input, shape index: {}]
  %s2 = inlined_call_operand.vmem [shape: f32[1,128], index: 2, kind: input, shape index: {}]
  %s3 = inlined_call_operand.vmem [shape: f32[1,128], index: 3, kind: input, shape index: {}]
  %s4 = inlined_call_operand.vmem [shape: f32[2,12,128], index: 4, kind: output, shape index: {}]
  %s5 = sld [smem:[#allocation0]]
  $region53: #{mapping_forward.3} parent=0
    _
  %s7 = ssub.s32 1, %s5
  %s8 = scalar_select 0, %s7, %s5
  loop: start=0, step=1, limit=4
  $region2: #{mapping_forward.3} parent=0 // loop_pre_header
    _
  $region3: #{mapping_forward.3} parent=0 // loop_header
    %s10 = sphi 0, %s14
    %p11 = scmp.ge.s32.totalorder %s10, 4
    %s17 = sphi 0, %s29
    %s18 = sphi 0, %s25
    %s19 = sphi 0, %s17
    %s20 = sphi 0, %s18
    %s21 = sphi 0, %s19
    %s22 = sphi 0, %s20
    %s38 = sphi 0, %s40
    %s41 = sphi 0, %s38
    %s42 = sphi 0, %s41
    %s58 = sphi 0, %s42
    %s62 = sphi 0, %s62
    %s64 = sphi 0, %s62
    %s65 = sphi 0, %s64
    %s79 = sphi 0, %s65
    %s83 = sphi 0, %s83
    %s85 = sphi 0, %s83
    %s86 = sphi 0, %s85
    %s100 = sphi 0, %s86
    %s104 = sphi 0, %s104
    %s106 = sphi 0, %s104
    %s107 = sphi 0, %s106
    %s121 = sphi 0, %s107
    %s129 = sphi 0, %s131
    %s132 = sphi 0, %s129
    %s133 = sphi 0, %s132
    %s149 = sphi 0, %s133
  $region4: #{mapping_forward.3} parent=0 // loop_header_branch
    %13 = sbr.rel (%p11) target = $region8
  $region5: #{mapping_forward.3} parent=0 // loop_body
    %s15 = ssub.s32 %s10, 1
    %s16 = ssub.s32 %s10, 2
    %s23 = sadd.s32 1, %s18
    %p24 = scmp.ge.s32.totalorder %s23, 1
    %s25 = scalar_select %p24, 0, %s23
    %s26 = sadd.s32 1, %s17
    %s27 = scalar_select %p24, %s26, %s17
    %p28 = scmp.ge.s32.totalorder %s27, 2
    %s29 = scalar_select %p28, 0, %s27
    %p30 = scmp.lt.s32.totalorder %s18, 0
    %s31 = scalar_select %p30, %s18, 0
    %p32 = scmp.lt.s32.totalorder %s25, 0
    %s33 = scalar_select %p32, %s25, 0
    %s34 = ssub.s32 %s17, %s29
    %s35 = ssub.s32 %s31, %s33
    %s36 = sor.u32 %s34, %s35
    %p37 = scmp.eq.s32.totalorder %s36, 0
    %s39 = sadd.s32 %s38, 1
    %s40 = scalar_select %p37, %s38, %s39
    %p43 = pneg %p37
    %p44 = scmp.eq.s32.totalorder %s10, 1
    %p45 = por %p43, %p44
    %p46 = scmp.ne.s32.totalorder %s38, %s41
    %p47 = scmp.eq.s32.totalorder %s10, 0
    %p48 = por %p46, %p47
    %p49 = scmp.ne.s32.totalorder %s38, %s41
    %p50 = scmp.eq.s32.totalorder %s15, 1
    %p51 = por %p49, %p50
    %p52 = scmp.ne.s32.totalorder %s41, %s42
    %p53 = scmp.eq.s32.totalorder %s15, 0
    %p54 = por %p52, %p53
    %p55 = scmp.ne.s32.totalorder %s41, %s42
    %p56 = scmp.eq.s32.totalorder %s16, 1
    %p57 = por %p55, %p56
    %p59 = scmp.ne.s32.totalorder %s42, %s58
    %p60 = scmp.eq.s32.totalorder %s16, 0
    %p61 = por %p59, %p60
    %s63 = sadd.s32 %s62, 1
    %p66 = scmp.eq.s32.totalorder %s10, 1
    %p67 = scmp.ne.s32.totalorder %s62, %s64
    %p68 = scmp.eq.s32.totalorder %s10, 0
    %p69 = por %p67, %p68
    %p70 = scmp.ne.s32.totalorder %s62, %s64
    %p71 = scmp.eq.s32.totalorder %s15, 1
    %p72 = por %p70, %p71
    %p73 = scmp.ne.s32.totalorder %s64, %s65
    %p74 = scmp.eq.s32.totalorder %s15, 0
    %p75 = por %p73, %p74
    %p76 = scmp.ne.s32.totalorder %s64, %s65
    %p77 = scmp.eq.s32.totalorder %s16, 1
    %p78 = por %p76, %p77
    %p80 = scmp.ne.s32.totalorder %s65, %s79
    %p81 = scmp.eq.s32.totalorder %s16, 0
    %p82 = por %p80, %p81
    %s84 = sadd.s32 %s83, 1
    %p87 = scmp.eq.s32.totalorder %s10, 1
    %p88 = scmp.ne.s32.totalorder %s83, %s85
    %p89 = scmp.eq.s32.totalorder %s10, 0
    %p90 = por %p88, %p89
    %p91 = scmp.ne.s32.totalorder %s83, %s85
    %p92 = scmp.eq.s32.totalorder %s15, 1
    %p93 = por %p91, %p92
    %p94 = scmp.ne.s32.totalorder %s85, %s86
    %p95 = scmp.eq.s32.totalorder %s15, 0
    %p96 = por %p94, %p95
    %p97 = scmp.ne.s32.totalorder %s85, %s86
    %p98 = scmp.eq.s32.totalorder %s16, 1
    %p99 = por %p97, %p98
    %p101 = scmp.ne.s32.totalorder %s86, %s100
    %p102 = scmp.eq.s32.totalorder %s16, 0
    %p103 = por %p101, %p102
    %s105 = sadd.s32 %s104, 1
    %p108 = scmp.eq.s32.totalorder %s10, 1
    %p109 = scmp.ne.s32.totalorder %s104, %s106
    %p110 = scmp.eq.s32.totalorder %s10, 0
    %p111 = por %p109, %p110
    %p112 = scmp.ne.s32.totalorder %s104, %s106
    %p113 = scmp.eq.s32.totalorder %s15, 1
    %p114 = por %p112, %p113
    %p115 = scmp.ne.s32.totalorder %s106, %s107
    %p116 = scmp.eq.s32.totalorder %s15, 0
    %p117 = por %p115, %p116
    %p118 = scmp.ne.s32.totalorder %s106, %s107
    %p119 = scmp.eq.s32.totalorder %s16, 1
    %p120 = por %p118, %p119
    %p122 = scmp.ne.s32.totalorder %s107, %s121
    %p123 = scmp.eq.s32.totalorder %s16, 0
    %p124 = por %p122, %p123
    %s125 = ssub.s32 %s17, %s29
    %s126 = ssub.s32 %s18, %s25
    %s127 = sor.u32 %s125, %s126
    %p128 = scmp.eq.s32.totalorder %s127, 0
    %s130 = sadd.s32 %s129, 1
    %s131 = scalar_select %p128, %s129, %s130
    %p134 = pneg %p128
    %p135 = scmp.eq.s32.totalorder %s10, 1
    %p136 = por %p134, %p135
    %p137 = scmp.ne.s32.totalorder %s129, %s132
    %p138 = scmp.eq.s32.totalorder %s10, 0
    %p139 = por %p137, %p138
    %p140 = scmp.ne.s32.totalorder %s129, %s132
    %p141 = scmp.eq.s32.totalorder %s15, 1
    %p142 = por %p140, %p141
    %p143 = scmp.ne.s32.totalorder %s132, %s133
    %p144 = scmp.eq.s32.totalorder %s15, 0
    %p145 = por %p143, %p144
    %p146 = scmp.ne.s32.totalorder %s132, %s133
    %p147 = scmp.eq.s32.totalorder %s16, 1
    %p148 = por %p146, %p147
    %p150 = scmp.ne.s32.totalorder %s133, %s149
    %p151 = scmp.eq.s32.totalorder %s16, 0
    %p152 = por %p150, %p151
    %p153 = scmp.le.s32.totalorder 1, %s10
    %p154 = scmp.lt.s32.totalorder %s10, 3
    %p155 = pnand %p153, %p154
    %p156 = pneg %p155
    // Predicated region
    $region9: #{mapping_forward.3} parent=5 // pred_check
      _
    $region10: #{mapping_forward.3} parent=5 // pred_check_branch
      %158 = sbr.rel (%p155) target = $region12
    $region11: #{mapping_forward.3} parent=5 // pred_region
      %s159 = ssub.s32 %s10, 1
      // Predicated region
      $region13: #{mapping_forward.3} parent=11 // pred_check
        %p160 = pneg %p75
      $region14: #{mapping_forward.3} parent=11 // pred_check_branch
        %162 = sbr.rel (%p160) target = $region16
      $region15: #{mapping_forward.3} parent=11 // pred_region
        _
      $region16: #{mapping_forward.3} parent=11 // pred_fallthru
        _
      // Predicated region
      $region17: #{mapping_forward.3} parent=11 // pred_check
        %p163 = pneg %p96
      $region18: #{mapping_forward.3} parent=11 // pred_check_branch
        %165 = sbr.rel (%p163) target = $region20
      $region19: #{mapping_forward.3} parent=11 // pred_region
        _
      $region20: #{mapping_forward.3} parent=11 // pred_fallthru
        _
      // Predicated region
      $region21: #{mapping_forward.3} parent=11 // pred_check
        %p166 = pneg %p117
      $region22: #{mapping_forward.3} parent=11 // pred_check_branch
        %168 = sbr.rel (%p166) target = $region24
      $region23: #{mapping_forward.3} parent=11 // pred_region
        _
      $region24: #{mapping_forward.3} parent=11 // pred_fallthru
        _
    $region12: #{mapping_forward.3} parent=5 // pred_fallthru
      _
    %p169 = scmp.lt.s32.totalorder %s10, 2
    // Predicated region
    $region25: #{mapping_forward.3} parent=5 // pred_check
      %p170 = pneg %p169
    $region26: #{mapping_forward.3} parent=5 // pred_check_branch
      %172 = sbr.rel (%p170) target = $region28
    $region27: #{mapping_forward.3} parent=5 // pred_region
      // Predicated region
      $region29: #{mapping_forward.3} parent=27 // pred_check
        %p173 = pneg %p48
      $region30: #{mapping_forward.3} parent=27 // pred_check_branch
        %175 = sbr.rel (%p173) target = $region32
      $region31: #{mapping_forward.3} parent=27 // pred_region
        %p176 = scmp.lt.s32.totalorder %s18, 0
        %s177 = scalar_select %p176, %s18, 0
        %s178 = smul.u32 2, %s177
        %p179 = scmp.lt.s32.totalorder %s17, 1
        %s180 = scalar_select %p179, %s17, 1
        %p181 = scmp.lt.s32.totalorder %s178, 1
        %s182 = scalar_select %p181, %s178, 1
        %s183 = smul.addr %s180, 2
        %s184 = sadd.s32 %s182, %s183
        %s185 = smul.addr %s184, 4
        %s186 = scalar_lea.vmem %s0, %s185
        %p187 = scmp.lt.s32.totalorder %s18, 0
        %s188 = scalar_select %p187, %s18, 0
        %s189 = smul.u32 2, %s188
      $region32: #{mapping_forward.3} parent=27 // pred_fallthru
        _
    $region28: #{mapping_forward.3} parent=5 // pred_fallthru
      _
    %p190 = scmp.le.s32.totalorder 1, %s10
    %p191 = scmp.lt.s32.totalorder %s10, 3
    %p192 = pnand %p190, %p191
    %p193 = pneg %p192
    // Predicated region
    $region33: #{mapping_forward.3} parent=5 // pred_check
      _
    $region34: #{mapping_forward.3} parent=5 // pred_check_branch
      %195 = sbr.rel (%p192) target = $region36
    $region35: #{mapping_forward.3} parent=5 // pred_region
      %s196 = ssub.s32 %s10, 1
      %p197 = scmp.lt.s32.totalorder %s20, 0
      %s198 = scalar_select %p197, %s20, 0
      %s199 = smul.u32 2, %s198
      %p200 = scmp.lt.s32.totalorder %s19, 1
      %s201 = scalar_select %p200, %s19, 1
      %p202 = scmp.lt.s32.totalorder %s199, 1
      %s203 = scalar_select %p202, %s199, 1
      %s204 = smul.addr %s201, 2
      %s205 = sadd.s32 %s203, %s204
      %s206 = smul.addr %s205, 4
      %s207 = scalar_lea.vmem %s0, %s206
      %p208 = pneg %p54
      %p209 = pneg %p51
      %p210 = pneg %p75
      %p211 = pneg %p72
      %p212 = pneg %p96
      %p213 = pneg %p93
      %p214 = pneg %p117
      %p215 = pneg %p114
      %p216 = pneg %p145
      %p217 = pneg %p142
      %s218 = smul.u32 2, %s20
      %p219 = scmp.lt.s32.totalorder %s19, 1
      %s220 = scalar_select %p219, %s19, 1
      %p221 = scmp.lt.s32.totalorder %s218, 1
      %s222 = scalar_select %p221, %s218, 1
      %s223 = smul.addr %s220, 2
      %s224 = sadd.s32 %s222, %s223
      %s225 = smul.addr %s224, 8
      %s226 = scalar_lea.vmem %s4, %s225
      %p227 = scmp.lt.s32.totalorder %s20, 0
      %s228 = scalar_select %p227, %s20, 0
      %s229 = smul.u32 2, %s228
      %p230 = scmp.lt.s32.totalorder %s19, 1
      %s231 = scalar_select %p230, %s19, 1
      %p232 = scmp.lt.s32.totalorder %s229, 1
      %s233 = scalar_select %p232, %s229, 1
      %s234 = smul.addr %s231, 2
      %s235 = sadd.s32 %s233, %s234
      %s236 = smul.addr %s235, 4
      %s237 = scalar_lea.vmem %s0, %s236
      %p238 = scmp.lt.s32.totalorder %s20, 0
      %s239 = scalar_select %p238, %s20, 0
      %s240 = smul.u32 2, %s239
      %s241 = smul.u32 2, %s20
      %p242 = scmp.lt.s32.totalorder %s19, 1
      %s243 = scalar_select %p242, %s19, 1
      %p244 = scmp.lt.s32.totalorder %s241, 1
      %s245 = scalar_select %p244, %s241, 1
      %s246 = smul.addr %s243, 2
      %s247 = sadd.s32 %s245, %s246
      %s248 = smul.addr %s247, 8
      %s249 = scalar_lea.vmem %s4, %s248
      %s250 = smul.u32 2, %s20
      %v252 = vld [vmem:[%s237] sm:$0xf]
      %v253 = vld [vmem:[%s237 + $0x4] sm:$0xf]
      %v254 = vld [vmem:[%s1] sm:$0xf]
      %v255 = vld [vmem:[%s1 + $0x4] sm:$0xf]
      %v256 = vld [vmem:[%s2] sm:$0x1]
      %v258 = vperm.slane %v256, 0
      %v262 = vunpack.c.l.b16 %v252
      %v263 = vunpack.c.l.b16 %v253
      %v264 = vpack.c.b16 %v263, %v262
      %v267 = vunpack.c.l.b16 %v254
      %v268 = vunpack.c.l.b16 %v255
      %v269 = vpack.c.b16 %v268, %v267
      %vm271 = vcmask 130048
      %v273 = vsel %vm271, %v264, 0
      %275 = vmatpush.bf16.msra.mxu0 0
      %276 = vmatpush.bf16.msra.mxu0 0
      %277 = vmatpush.bf16.msra.mxu0 0
      %278 = vmatpush.bf16.msra.mxu0 0
      %279 = vmatpush.bf16.msra.mxu0 0
      %280 = vmatpush.bf16.msra.mxu0 0
      %281 = vmatpush.bf16.msra.mxu0 0
      %282 = vmatpush.bf16.msra.mxu0 %v269
      %283 = vmatmul.bf16.gmra.mxu0 %v273
      %v284 = vpop.f32.mrf.mxu0
      %v285 = vadd.f32 %v258, %v284
      %v286 = vpop.f32.mrf.mxu0
      %v287 = vadd.f32 %v258, %v286
      %288 = vdwg.mxu0
      %289 = vst [vmem:[%s249] sm:$0xff] %v285
      %290 = vst [vmem:[%s249 + $0x8] sm:$0xff] %v287
      %p291 = scmp.eq.s32.totalorder %s20, 0
      // Predicated region
      $region37: #{mapping_forward.3} parent=35 // pred_check
        %p292 = pneg %p291
      $region38: #{mapping_forward.3} parent=35 // pred_check_branch
        %294 = sbr.rel (%p292) target = $region40
      $region39: #{mapping_forward.3} parent=35 // pred_region
        %v295 = vld [vmem:[%s3] sm:$0x1]
        %296 = vst [vmem:[%s249 + $0xb] sm:$0x1] %v295
      $region40: #{mapping_forward.3} parent=35 // pred_fallthru
        _
      %s297 = smul.u32 2, %s20
      %p298 = scmp.lt.s32.totalorder %s19, 1
      %s299 = scalar_select %p298, %s19, 1
      %p300 = scmp.lt.s32.totalorder %s297, 1
      %s301 = scalar_select %p300, %s297, 1
      %s302 = smul.addr %s299, 2
      %s303 = sadd.s32 %s301, %s302
      %s304 = smul.addr %s303, 8
      %s305 = scalar_lea.vmem %s4, %s304
      // Predicated region
      $region41: #{mapping_forward.3} parent=35 // pred_check
        %p306 = pneg %p142
      $region42: #{mapping_forward.3} parent=35 // pred_check_branch
        %308 = sbr.rel (%p306) target = $region44
      $region43: #{mapping_forward.3} parent=35 // pred_region
        %s309 = smul.u32 2, %s20
      $region44: #{mapping_forward.3} parent=35 // pred_fallthru
        _
    $region36: #{mapping_forward.3} parent=5 // pred_fallthru
      _
    %p310 = scmp.le.s32.totalorder 2, %s10
    // Predicated region
    $region45: #{mapping_forward.3} parent=5 // pred_check
      %p311 = pneg %p310
    $region46: #{mapping_forward.3} parent=5 // pred_check_branch
      %313 = sbr.rel (%p311) target = $region48
    $region47: #{mapping_forward.3} parent=5 // pred_region
      %s314 = ssub.s32 %s10, 2
      // Predicated region
      $region49: #{mapping_forward.3} parent=47 // pred_check
        %p315 = pneg %p148
      $region50: #{mapping_forward.3} parent=47 // pred_check_branch
        %317 = sbr.rel (%p315) target = $region52
      $region51: #{mapping_forward.3} parent=47 // pred_region
        %s318 = smul.u32 2, %s22
        %p319 = scmp.lt.s32.totalorder %s21, 1
        %s320 = scalar_select %p319, %s21, 1
        %p321 = scmp.lt.s32.totalorder %s318, 1
        %s322 = scalar_select %p321, %s318, 1
        %s323 = smul.addr %s320, 2
        %s324 = sadd.s32 %s322, %s323
        %s325 = smul.addr %s324, 8
        %s326 = scalar_lea.vmem %s4, %s325
      $region52: #{mapping_forward.3} parent=47 // pred_fallthru
        _
    $region48: #{mapping_forward.3} parent=5 // pred_fallthru
      _
  $region6: #{mapping_forward.3} parent=0 // loop_footer
    %s14 = sadd.s32 1, %s10
  $region7: #{mapping_forward.3} parent=0 // loop_footer_branch
    %9 = sbr.rel target = $region3
  $region8: #{mapping_forward.3} parent=0 // loop_exit
    _

// kernel: mapping_forward.2
$region0: #{mapping_forward.2}
  #allocation0 [shape = 'u32[]', space=smem, size = 0x4, offset = 0x4, fixed_abs, tag = 'smem constant byte address 0x4 - core index']
  #allocation1 [shape = 'u32[72,128]{1,0:T(1,128)}', space=vmem, size = 0x9000, scoped, tag = 'internal scratch']
  %s0 = inlined_call_operand.vmem [shape: bf16[2,8,32], index: 0, kind: input, shape index: {}]
  %s1 = inlined_call_operand.vmem [shape: bf16[32,128], index: 1, kind: input, shape index: {}]
  %s2 = inlined_call_operand.vmem [shape: f32[1,128], index: 2, kind: input, shape index: {}]
  %s3 = inlined_call_operand.vmem [shape: f32[1,128], index: 3, kind: input, shape index: {}]
  %s4 = inlined_call_operand.vmem [shape: f32[2,9,128], index: 4, kind: output, shape index: {}]
  %s5 = sld [smem:[#allocation0]]
  $region53: #{mapping_forward.2} parent=0
    _
  %s7 = ssub.s32 1, %s5
  %s8 = scalar_select 0, %s7, %s5
  loop: start=0, step=1, limit=4
  $region2: #{mapping_forward.2} parent=0 // loop_pre_header
    _
  $region3: #{mapping_forward.2} parent=0 // loop_header
    %s10 = sphi 0, %s14
    %p11 = scmp.ge.s32.totalorder %s10, 4
    %s17 = sphi 0, %s29
    %s18 = sphi 0, %s25
    %s19 = sphi 0, %s17
    %s20 = sphi 0, %s18
    %s21 = sphi 0, %s19
    %s22 = sphi 0, %s20
    %s38 = sphi 0, %s40
    %s41 = sphi 0, %s38
    %s42 = sphi 0, %s41
    %s58 = sphi 0, %s42
    %s62 = sphi 0, %s62
    %s64 = sphi 0, %s62
    %s65 = sphi 0, %s64
    %s79 = sphi 0, %s65
    %s83 = sphi 0, %s83
    %s85 = sphi 0, %s83
    %s86 = sphi 0, %s85
    %s100 = sphi 0, %s86
    %s104 = sphi 0, %s104
    %s106 = sphi 0, %s104
    %s107 = sphi 0, %s106
    %s121 = sphi 0, %s107
    %s129 = sphi 0, %s131
    %s132 = sphi 0, %s129
    %s133 = sphi 0, %s132
    %s149 = sphi 0, %s133
  $region4: #{mapping_forward.2} parent=0 // loop_header_branch
    %13 = sbr.rel (%p11) target = $region8
  $region5: #{mapping_forward.2} parent=0 // loop_body
    %s15 = ssub.s32 %s10, 1
    %s16 = ssub.s32 %s10, 2
    %s23 = sadd.s32 1, %s18
    %p24 = scmp.ge.s32.totalorder %s23, 1
    %s25 = scalar_select %p24, 0, %s23
    %s26 = sadd.s32 1, %s17
    %s27 = scalar_select %p24, %s26, %s17
    %p28 = scmp.ge.s32.totalorder %s27, 2
    %s29 = scalar_select %p28, 0, %s27
    %p30 = scmp.lt.s32.totalorder %s18, 0
    %s31 = scalar_select %p30, %s18, 0
    %p32 = scmp.lt.s32.totalorder %s25, 0
    %s33 = scalar_select %p32, %s25, 0
    %s34 = ssub.s32 %s17, %s29
    %s35 = ssub.s32 %s31, %s33
    %s36 = sor.u32 %s34, %s35
    %p37 = scmp.eq.s32.totalorder %s36, 0
    %s39 = sadd.s32 %s38, 1
    %s40 = scalar_select %p37, %s38, %s39
    %p43 = pneg %p37
    %p44 = scmp.eq.s32.totalorder %s10, 1
    %p45 = por %p43, %p44
    %p46 = scmp.ne.s32.totalorder %s38, %s41
    %p47 = scmp.eq.s32.totalorder %s10, 0
    %p48 = por %p46, %p47
    %p49 = scmp.ne.s32.totalorder %s38, %s41
    %p50 = scmp.eq.s32.totalorder %s15, 1
    %p51 = por %p49, %p50
    %p52 = scmp.ne.s32.totalorder %s41, %s42
    %p53 = scmp.eq.s32.totalorder %s15, 0
    %p54 = por %p52, %p53
    %p55 = scmp.ne.s32.totalorder %s41, %s42
    %p56 = scmp.eq.s32.totalorder %s16, 1
    %p57 = por %p55, %p56
    %p59 = scmp.ne.s32.totalorder %s42, %s58
    %p60 = scmp.eq.s32.totalorder %s16, 0
    %p61 = por %p59, %p60
    %s63 = sadd.s32 %s62, 1
    %p66 = scmp.eq.s32.totalorder %s10, 1
    %p67 = scmp.ne.s32.totalorder %s62, %s64
    %p68 = scmp.eq.s32.totalorder %s10, 0
    %p69 = por %p67, %p68
    %p70 = scmp.ne.s32.totalorder %s62, %s64
    %p71 = scmp.eq.s32.totalorder %s15, 1
    %p72 = por %p70, %p71
    %p73 = scmp.ne.s32.totalorder %s64, %s65
    %p74 = scmp.eq.s32.totalorder %s15, 0
    %p75 = por %p73, %p74
    %p76 = scmp.ne.s32.totalorder %s64, %s65
    %p77 = scmp.eq.s32.totalorder %s16, 1
    %p78 = por %p76, %p77
    %p80 = scmp.ne.s32.totalorder %s65, %s79
    %p81 = scmp.eq.s32.totalorder %s16, 0
    %p82 = por %p80, %p81
    %s84 = sadd.s32 %s83, 1
    %p87 = scmp.eq.s32.totalorder %s10, 1
    %p88 = scmp.ne.s32.totalorder %s83, %s85
    %p89 = scmp.eq.s32.totalorder %s10, 0
    %p90 = por %p88, %p89
    %p91 = scmp.ne.s32.totalorder %s83, %s85
    %p92 = scmp.eq.s32.totalorder %s15, 1
    %p93 = por %p91, %p92
    %p94 = scmp.ne.s32.totalorder %s85, %s86
    %p95 = scmp.eq.s32.totalorder %s15, 0
    %p96 = por %p94, %p95
    %p97 = scmp.ne.s32.totalorder %s85, %s86
    %p98 = scmp.eq.s32.totalorder %s16, 1
    %p99 = por %p97, %p98
    %p101 = scmp.ne.s32.totalorder %s86, %s100
    %p102 = scmp.eq.s32.totalorder %s16, 0
    %p103 = por %p101, %p102
    %s105 = sadd.s32 %s104, 1
    %p108 = scmp.eq.s32.totalorder %s10, 1
    %p109 = scmp.ne.s32.totalorder %s104, %s106
    %p110 = scmp.eq.s32.totalorder %s10, 0
    %p111 = por %p109, %p110
    %p112 = scmp.ne.s32.totalorder %s104, %s106
    %p113 = scmp.eq.s32.totalorder %s15, 1
    %p114 = por %p112, %p113
    %p115 = scmp.ne.s32.totalorder %s106, %s107
    %p116 = scmp.eq.s32.totalorder %s15, 0
    %p117 = por %p115, %p116
    %p118 = scmp.ne.s32.totalorder %s106, %s107
    %p119 = scmp.eq.s32.totalorder %s16, 1
    %p120 = por %p118, %p119
    %p122 = scmp.ne.s32.totalorder %s107, %s121
    %p123 = scmp.eq.s32.totalorder %s16, 0
    %p124 = por %p122, %p123
    %s125 = ssub.s32 %s17, %s29
    %s126 = ssub.s32 %s18, %s25
    %s127 = sor.u32 %s125, %s126
    %p128 = scmp.eq.s32.totalorder %s127, 0
    %s130 = sadd.s32 %s129, 1
    %s131 = scalar_select %p128, %s129, %s130
    %p134 = pneg %p128
    %p135 = scmp.eq.s32.totalorder %s10, 1
    %p136 = por %p134, %p135
    %p137 = scmp.ne.s32.totalorder %s129, %s132
    %p138 = scmp.eq.s32.totalorder %s10, 0
    %p139 = por %p137, %p138
    %p140 = scmp.ne.s32.totalorder %s129, %s132
    %p141 = scmp.eq.s32.totalorder %s15, 1
    %p142 = por %p140, %p141
    %p143 = scmp.ne.s32.totalorder %s132, %s133
    %p144 = scmp.eq.s32.totalorder %s15, 0
    %p145 = por %p143, %p144
    %p146 = scmp.ne.s32.totalorder %s132, %s133
    %p147 = scmp.eq.s32.totalorder %s16, 1
    %p148 = por %p146, %p147
    %p150 = scmp.ne.s32.totalorder %s133, %s149
    %p151 = scmp.eq.s32.totalorder %s16, 0
    %p152 = por %p150, %p151
    %p153 = scmp.le.s32.totalorder 1, %s10
    %p154 = scmp.lt.s32.totalorder %s10, 3
    %p155 = pnand %p153, %p154
    %p156 = pneg %p155
    // Predicated region
    $region9: #{mapping_forward.2} parent=5 // pred_check
      _
    $region10: #{mapping_forward.2} parent=5 // pred_check_branch
      %158 = sbr.rel (%p155) target = $region12
    $region11: #{mapping_forward.2} parent=5 // pred_region
      %s159 = ssub.s32 %s10, 1
      // Predicated region
      $region13: #{mapping_forward.2} parent=11 // pred_check
        %p160 = pneg %p75
      $region14: #{mapping_forward.2} parent=11 // pred_check_branch
        %162 = sbr.rel (%p160) target = $region16
      $region15: #{mapping_forward.2} parent=11 // pred_region
        _
      $region16: #{mapping_forward.2} parent=11 // pred_fallthru
        _
      // Predicated region
      $region17: #{mapping_forward.2} parent=11 // pred_check
        %p163 = pneg %p96
      $region18: #{mapping_forward.2} parent=11 // pred_check_branch
        %165 = sbr.rel (%p163) target = $region20
      $region19: #{mapping_forward.2} parent=11 // pred_region
        _
      $region20: #{mapping_forward.2} parent=11 // pred_fallthru
        _
      // Predicated region
      $region21: #{mapping_forward.2} parent=11 // pred_check
        %p166 = pneg %p117
      $region22: #{mapping_forward.2} parent=11 // pred_check_branch
        %168 = sbr.rel (%p166) target = $region24
      $region23: #{mapping_forward.2} parent=11 // pred_region
        _
      $region24: #{mapping_forward.2} parent=11 // pred_fallthru
        _
    $region12: #{mapping_forward.2} parent=5 // pred_fallthru
      _
    %p169 = scmp.lt.s32.totalorder %s10, 2
    // Predicated region
    $region25: #{mapping_forward.2} parent=5 // pred_check
      %p170 = pneg %p169
    $region26: #{mapping_forward.2} parent=5 // pred_check_branch
      %172 = sbr.rel (%p170) target = $region28
    $region27: #{mapping_forward.2} parent=5 // pred_region
      // Predicated region
      $region29: #{mapping_forward.2} parent=27 // pred_check
        %p173 = pneg %p48
      $region30: #{mapping_forward.2} parent=27 // pred_check_branch
        %175 = sbr.rel (%p173) target = $region32
      $region31: #{mapping_forward.2} parent=27 // pred_region
        %p176 = scmp.lt.s32.totalorder %s18, 0
        %s177 = scalar_select %p176, %s18, 0
        %s178 = smul.u32 2, %s177
        %s179 = ssub.s32 1, %s178
        %s180 = smul.u32 4, %s179
        %p181 = scmp.lt.s32.totalorder %s17, 1
        %s182 = scalar_select %p181, %s17, 1
        %p183 = scmp.lt.s32.totalorder %s178, 0
        %s184 = scalar_select %p183, %s178, 0
        %s185 = sadd.s32 %s184, %s182
        %s186 = smul.addr %s185, 4
        %s187 = scalar_lea.vmem %s0, %s186
        %p188 = scmp.lt.s32.totalorder %s18, 0
        %s189 = scalar_select %p188, %s18, 0
        %s190 = smul.u32 2, %s189
        %s191 = ssub.s32 1, %s190
        %s192 = smul.u32 4, %s191
      $region32: #{mapping_forward.2} parent=27 // pred_fallthru
        _
    $region28: #{mapping_forward.2} parent=5 // pred_fallthru
      _
    %p193 = scmp.le.s32.totalorder 1, %s10
    %p194 = scmp.lt.s32.totalorder %s10, 3
    %p195 = pnand %p193, %p194
    %p196 = pneg %p195
    // Predicated region
    $region33: #{mapping_forward.2} parent=5 // pred_check
      _
    $region34: #{mapping_forward.2} parent=5 // pred_check_branch
      %198 = sbr.rel (%p195) target = $region36
    $region35: #{mapping_forward.2} parent=5 // pred_region
      %s199 = ssub.s32 %s10, 1
      %p200 = scmp.lt.s32.totalorder %s20, 0
      %s201 = scalar_select %p200, %s20, 0
      %s202 = smul.u32 2, %s201
      %s203 = ssub.s32 1, %s202
      %s204 = smul.u32 4, %s203
      %p205 = scmp.lt.s32.totalorder %s19, 1
      %s206 = scalar_select %p205, %s19, 1
      %p207 = scmp.lt.s32.totalorder %s202, 0
      %s208 = scalar_select %p207, %s202, 0
      %s209 = sadd.s32 %s208, %s206
      %s210 = smul.addr %s209, 4
      %s211 = scalar_lea.vmem %s0, %s210
      %p212 = pneg %p54
      %p213 = pneg %p51
      %p214 = pneg %p75
      %p215 = pneg %p72
      %p216 = pneg %p96
      %p217 = pneg %p93
      %p218 = pneg %p117
      %p219 = pneg %p114
      %p220 = pneg %p145
      %p221 = pneg %p142
      %s222 = smul.u32 2, %s20
      %p223 = scmp.lt.s32.totalorder %s19, 1
      %s224 = scalar_select %p223, %s19, 1
      %p225 = scmp.lt.s32.totalorder %s222, 1
      %s226 = scalar_select %p225, %s222, 1
      %s227 = smul.addr %s224, 2
      %s228 = sadd.s32 %s226, %s227
      %s229 = smul.addr %s228, 8
      %s230 = scalar_lea.vmem %s4, %s229
      %p231 = scmp.lt.s32.totalorder %s20, 0
      %s232 = scalar_select %p231, %s20, 0
      %s233 = smul.u32 2, %s232
      %s234 = ssub.s32 1, %s233
      %s235 = smul.u32 4, %s234
      %p236 = scmp.lt.s32.totalorder %s19, 1
      %s237 = scalar_select %p236, %s19, 1
      %p238 = scmp.lt.s32.totalorder %s233, 0
      %s239 = scalar_select %p238, %s233, 0
      %s240 = sadd.s32 %s239, %s237
      %s241 = smul.addr %s240, 4
      %s242 = scalar_lea.vmem %s0, %s241
      %p243 = scmp.lt.s32.totalorder %s20, 0
      %s244 = scalar_select %p243, %s20, 0
      %s245 = smul.u32 2, %s244
      %s246 = ssub.s32 1, %s245
      %s247 = smul.u32 4, %s246
      %s248 = smul.u32 2, %s20
      %p249 = scmp.lt.s32.totalorder %s19, 1
      %s250 = scalar_select %p249, %s19, 1
      %p251 = scmp.lt.s32.totalorder %s248, 1
      %s252 = scalar_select %p251, %s248, 1
      %s253 = smul.addr %s250, 2
      %s254 = sadd.s32 %s252, %s253
      %s255 = smul.addr %s254, 8
      %s256 = scalar_lea.vmem %s4, %s255
      %s257 = smul.u32 2, %s20
      %v259 = vld [vmem:[%s242] sm:$0xf]
      %v260 = vld [vmem:[%s242 + $0x4] sm:$0xf]
      %v261 = vld [vmem:[%s1] sm:$0xf]
      %v262 = vld [vmem:[%s1 + $0x4] sm:$0xf]
      %v263 = vld [vmem:[%s1 + $0x8] sm:$0xf]
      %v264 = vld [vmem:[%s1 + $0xc] sm:$0xf]
      %v265 = vld [vmem:[%s2] sm:$0x1]
      %v267 = vperm.slane %v265, 0
      %v271 = vunpack.c.l.b16 %v259
      %v272 = vunpack.c.l.b16 %v260
      %v273 = vpack.c.b16 %v272, %v271
      %v278 = vunpack.c.l.b16 %v261
      %v279 = vunpack.c.l.b16 %v262
      %v280 = vunpack.c.l.b16 %v263
      %v281 = vunpack.c.l.b16 %v264
      %v282 = vpack.c.b16 %v279, %v278
      %v283 = vpack.c.b16 %v281, %v280
      %vm286 = vcmask 261120
      %v288 = vsel %vm286, %v273, 0
      %290 = vmatpush.bf16.msra.mxu0 0
      %291 = vmatpush.bf16.msra.mxu0 0
      %292 = vmatpush.bf16.msra.mxu0 0
      %293 = vmatpush.bf16.msra.mxu0 0
      %294 = vmatpush.bf16.msra.mxu0 0
      %295 = vmatpush.bf16.msra.mxu0 0
      %296 = vmatpush.bf16.msra.mxu0 %v283
      %297 = vmatpush.bf16.msra.mxu0 %v282
      %298 = vmatmul.bf16.gmra.mxu0 %v288
      %v299 = vpop.f32.mrf.mxu0
      %v300 = vadd.f32 %v267, %v299
      %v301 = vpop.f32.mrf.mxu0
      %v302 = vadd.f32 %v267, %v301
      %303 = vdwg.mxu0
      %304 = vst [vmem:[%s256] sm:$0xff] %v300
      %305 = vst [vmem:[%s256 + $0x8] sm:$0xff] %v302
      %p306 = scmp.eq.s32.totalorder %s20, 0
      // Predicated region
      $region37: #{mapping_forward.2} parent=35 // pred_check
        %p307 = pneg %p306
      $region38: #{mapping_forward.2} parent=35 // pred_check_branch
        %309 = sbr.rel (%p307) target = $region40
      $region39: #{mapping_forward.2} parent=35 // pred_region
        %v310 = vld [vmem:[%s3] sm:$0x1]
        %311 = vst [vmem:[%s256 + $0x8] sm:$0x1] %v310
      $region40: #{mapping_forward.2} parent=35 // pred_fallthru
        _
      %s312 = smul.u32 2, %s20
      %p313 = scmp.lt.s32.totalorder %s19, 1
      %s314 = scalar_select %p313, %s19, 1
      %p315 = scmp.lt.s32.totalorder %s312, 1
      %s316 = scalar_select %p315, %s312, 1
      %s317 = smul.addr %s314, 2
      %s318 = sadd.s32 %s316, %s317
      %s319 = smul.addr %s318, 8
      %s320 = scalar_lea.vmem %s4, %s319
      // Predicated region
      $region41: #{mapping_forward.2} parent=35 // pred_check
        %p321 = pneg %p142
      $region42: #{mapping_forward.2} parent=35 // pred_check_branch
        %323 = sbr.rel (%p321) target = $region44
      $region43: #{mapping_forward.2} parent=35 // pred_region
        %s324 = smul.u32 2, %s20
      $region44: #{mapping_forward.2} parent=35 // pred_fallthru
        _
    $region36: #{mapping_forward.2} parent=5 // pred_fallthru
      _
    %p325 = scmp.le.s32.totalorder 2, %s10
    // Predicated region
    $region45: #{mapping_forward.2} parent=5 // pred_check
      %p326 = pneg %p325
    $region46: #{mapping_forward.2} parent=5 // pred_check_branch
      %328 = sbr.rel (%p326) target = $region48
    $region47: #{mapping_forward.2} parent=5 // pred_region
      %s329 = ssub.s32 %s10, 2
      // Predicated region
      $region49: #{mapping_forward.2} parent=47 // pred_check
        %p330 = pneg %p148
      $region50: #{mapping_forward.2} parent=47 // pred_check_branch
        %332 = sbr.rel (%p330) target = $region52
      $region51: #{mapping_forward.2} parent=47 // pred_region
        %s333 = smul.u32 2, %s22
        %p334 = scmp.lt.s32.totalorder %s21, 1
        %s335 = scalar_select %p334, %s21, 1
        %p336 = scmp.lt.s32.totalorder %s333, 1
        %s337 = scalar_select %p336, %s333, 1
        %s338 = smul.addr %s335, 2
        %s339 = sadd.s32 %s337, %s338
        %s340 = smul.addr %s339, 8
        %s341 = scalar_lea.vmem %s4, %s340
      $region52: #{mapping_forward.2} parent=47 // pred_fallthru
        _
    $region48: #{mapping_forward.2} parent=5 // pred_fallthru
      _
  $region6: #{mapping_forward.2} parent=0 // loop_footer
    %s14 = sadd.s32 1, %s10
  $region7: #{mapping_forward.2} parent=0 // loop_footer_branch
    %9 = sbr.rel target = $region3
  $region8: #{mapping_forward.2} parent=0 // loop_exit
    _

</llo_original>
